<compile_context>
chip_gen: v5e
topology: v5e:2x2
jax: 0.10.0
libtpu: 0.0.40
codegen_flags: <defaults>
</compile_context>

<pallas_src>
import jax
import jax.numpy as jnp
from jax.experimental import pallas as pl
from jax.experimental.pallas import tpu as pltpu


def _round_up(x, m):
    return ((x + m - 1) // m) * m


def coma_actor_kernel(obs_ref, ids_ref, avail_ref, eps_ref,
                      w_rep_ref, b_rep_ref,
                      wa1_s_ref, wa1_id_ref,
                      wa2_ref, ba2_ref,
                      probs_ref):
    eps = eps_ref[0, 0]  # scalar from SMEM

    # ---- actor representation (Basic_MLP, one hidden layer, ReLU) -> 'state'
    # bf16 operands, f32 accumulation on the MXU.
    state = jnp.dot(obs_ref[...], w_rep_ref[...], preferred_element_type=jnp.float32)
    state = jnp.maximum(state + b_rep_ref[...], 0.0)

    # ---- parameter sharing: concat([state, agent_ids]) @ Wa1 + ba1
    # Implemented as a split matmul; ba1 is pre-folded into the one-hot id rows
    # (one-hot rows sum to 1), so no separate bias add is needed here.
    h = (jnp.dot(state.astype(jnp.bfloat16), wa1_s_ref[...],
                 preferred_element_type=jnp.float32)
         + jnp.dot(ids_ref[...], wa1_id_ref[...],
                   preferred_element_type=jnp.float32))
    h = jnp.maximum(h, 0.0)

    # ---- ActorNet output layer -> logits
    logits = (jnp.dot(h.astype(jnp.bfloat16), wa2_ref[...],
                      preferred_element_type=jnp.float32)
              + ba2_ref[...])

    # ---- softmax + epsilon mixing (all f32). Reciprocal goes to the EUP slot and
    # is fused with the (1 - eps) scale: probs = e * ((1-eps)/sum_e) + eps/n.
    m = jnp.max(logits, axis=-1, keepdims=True)
    e = jnp.exp(logits - m)
    denom = jnp.sum(e, axis=-1, keepdims=True)
    scale = (1.0 - eps) * pl.reciprocal(denom, approx=True)
    n_actions = jnp.float32(logits.shape[-1])
    probs = e * scale + eps / n_actions

    # ---- zero out unavailable actions (act_probs[avail == 0] = 0).
    # NOTE: intentionally NOT renormalized (matches the PyTorch reference); any
    # downstream sampler must renormalize. where-form kept (not probs*avail) so
    # non-{0,1} avail values behave exactly like the reference.
    probs = jnp.where(avail_ref[...] == 0.0, 0.0, probs)

    probs_ref[...] = probs


def coma_policy_forward(observation, agent_ids, avail_actions, epsilon, params,
                        key="agent_0", tile_b=1024):
    """Mirrors COMA_Policy.forward for the non-RNN, parameter-sharing case.

    Returns (rnn_hidden_new, act_probs) dicts like the PyTorch module.
    """
    obs = observation[key]
    avail = avail_actions[key].astype(jnp.float32)
    (w_rep, b_rep, wa1_s, wa1_id, ba1, wa2, ba2) = params

    B, obs_dim = obs.shape
    n_agents = agent_ids.shape[1]
    rep_out = w_rep.shape[1]
    hidden = wa1_s.shape[1]
    n_actions = wa2.shape[1]

    # --- one-time prep outside the hot kernel ---
    # Fold ba1 into the one-hot id rows (exact because one-hot rows sum to 1),
    # and cast all matmul operands to bf16 (MXU-native). Biases stay f32.
    obs_b = obs.astype(jnp.bfloat16)
    ids_b = agent_ids.astype(jnp.bfloat16)
    w_rep_b = w_rep.astype(jnp.bfloat16)
    wa1_s_b = wa1_s.astype(jnp.bfloat16)
    wa1_idb = (wa1_id + ba1).astype(jnp.bfloat16)   # [n_agents, hidden]
    wa2_b = wa2.astype(jnp.bfloat16)
    b_rep_f = b_rep.astype(jnp.float32)
    ba2_f = ba2.astype(jnp.float32)

    # --- row tiling: grid over batch, weights resident (constant index_map) ---
    assert tile_b % 8 == 0, "row tile must be a multiple of 8"
    tb = min(tile_b, _round_up(B, 8))
    B_pad = _round_up(B, tb)
    if B_pad != B:
        pad = B_pad - B
        obs_b = jnp.pad(obs_b, ((0, pad), (0, 0)))
        ids_b = jnp.pad(ids_b, ((0, pad), (0, 0)))
        avail = jnp.pad(avail, ((0, pad), (0, 0)))
    grid = (B_pad // tb,)

    eps_arr = jnp.full((1, 1), epsilon, dtype=jnp.float32)

    def row(c):   # per-grid-step row tile
        return pl.BlockSpec((tb, c), lambda i: (i, 0))

    def res(r, c):  # grid-invariant (stays resident in VMEM, no re-DMA)
        return pl.BlockSpec((r, c), lambda i: (0, 0))

    # cost estimate for XLA's scheduler around the custom call
    flops = 2 * B_pad * (obs_dim * rep_out + rep_out * hidden
                         + n_agents * hidden + hidden * n_actions)
    weight_bytes = ((w_rep_b.size + wa1_s_b.size + wa1_idb.size + wa2_b.size) * 2
                    + (b_rep_f.size + ba2_f.size) * 4)
    bytes_accessed = (obs_b.size * 2 + ids_b.size * 2 + avail.size * 4
                      + B_pad * n_actions * 4 + weight_bytes)
    cost = pl.CostEstimate(flops=int(flops),
                           transcendentals=int(B_pad * n_actions),
                           bytes_accessed=int(bytes_accessed))

    # explicit VMEM budget (2x buffered row tiles + resident weights) with
    # generous headroom -> portable to v7x's smaller VMEM.
    tile_bytes = tb * (obs_dim * 2 + n_agents * 2 + n_actions * 4 + n_actions * 4)
    vmem_limit = int(min(64 * 1024 * 1024,
                         max(4 * 1024 * 1024, 8 * (2 * tile_bytes + weight_bytes))))

    probs = pl.pallas_call(
        coma_actor_kernel,
        out_shape=jax.ShapeDtypeStruct((B_pad, n_actions), jnp.float32),
        grid=grid,
        in_specs=[
            row(obs_dim),                                        # obs          [B, obs_dim] bf16
            row(n_agents),                                       # agent_ids    [B, n_agents] bf16
            row(n_actions),                                      # avail mask   [B, n_actions] f32
            pl.BlockSpec(memory_space=pltpu.MemorySpace.SMEM),   # epsilon      (1,1) f32 scalar
            res(obs_dim, rep_out),                               # W_rep
            res(1, rep_out),                                     # b_rep
            res(rep_out, hidden),                                # Wa1 (state rows)
            res(n_agents, hidden),                               # Wa1 (id rows) + ba1 folded
            res(hidden, n_actions),                              # Wa2
            res(1, n_actions),                                   # ba2
        ],
        out_specs=row(n_actions),
        compiler_params=pltpu.CompilerParams(
            dimension_semantics=("parallel",),
            vmem_limit_bytes=vmem_limit),
        cost_estimate=cost,
    )(obs_b, ids_b, avail, eps_arr, w_rep_b, b_rep_f, wa1_s_b, wa1_idb, wa2_b, ba2_f)

    probs = probs[:B]
    rnn_hidden_new = {key: [None, None]}
    act_probs = {key: probs}
    return rnn_hidden_new, act_probs


def _reference_forward(observation, agent_ids, avail_actions, epsilon, params,
                       key="agent_0", matmul_dtype=jnp.float32):
    """Pure-JAX reference. matmul_dtype=bfloat16 mirrors the kernel's MXU dtypes."""
    obs = observation[key]
    avail = avail_actions[key]
    (w_rep, b_rep, wa1_s, wa1_id, ba1, wa2, ba2) = params
    md = matmul_dtype
    state = jax.nn.relu(
        jnp.dot(obs.astype(md), w_rep.astype(md),
                preferred_element_type=jnp.float32) + b_rep)
    h = jax.nn.relu(
        jnp.dot(state.astype(md), wa1_s.astype(md),
                preferred_element_type=jnp.float32)
        + jnp.dot(agent_ids.astype(md), (wa1_id + ba1).astype(md),
                  preferred_element_type=jnp.float32))
    logits = jnp.dot(h.astype(md), wa2.astype(md),
                     preferred_element_type=jnp.float32) + ba2
    probs = jax.nn.softmax(logits, axis=-1)
    probs = (1.0 - epsilon) * probs + epsilon / logits.shape[-1]
    probs = jnp.where(avail == 0.0, 0.0, probs)
    return probs


if __name__ == "__main__":
    # --- small, deterministic shapes consistent with the module ---
    n_envs, n_agents = 20, 3
    B = n_envs * n_agents          # 60 rows: not a tile multiple -> exercises padding
    obs_dim = 16                   # observation feature dim
    rep_out = 32                   # actor_representation output_shapes['state'][0]
    actor_hidden = 32              # actor_hidden_size = [32]
    n_actions = 8                  # Discrete(8)
    epsilon = 0.1

    root = jax.random.PRNGKey(0)
    k_obs, k_av, kw1, kb1, kw2, kw3, kb2, kw4, kb3 = jax.random.split(root, 9)

    # inputs
    obs = jax.random.normal(k_obs, (B, obs_dim), dtype=jnp.float32)
    agent_idx = jnp.tile(jnp.arange(n_agents), n_envs)
    agent_ids = jax.nn.one_hot(agent_idx, n_agents, dtype=jnp.float32)       # [B, n_agents]
    avail = (jax.random.uniform(k_av, (B, n_actions)) > 0.3).astype(jnp.float32)
    avail = avail.at[:, 0].set(1.0)                                          # >=1 available action

    # deterministic parameter init (synthetic, not a checkpoint)
    def init(k, shape, fan_in):
        return jax.random.normal(k, shape, dtype=jnp.float32) * (1.0 / jnp.sqrt(fan_in))

    w_rep = init(kw1, (obs_dim, rep_out), obs_dim)
    b_rep = init(kb1, (1, rep_out), rep_out)
    wa1_s = init(kw2, (rep_out, actor_hidden), rep_out + n_agents)     # rows for 'state'
    wa1_id = init(kw3, (n_agents, actor_hidden), rep_out + n_agents)   # rows for agent_ids
    ba1 = init(kb2, (1, actor_hidden), actor_hidden)
    wa2 = init(kw4, (actor_hidden, n_actions), actor_hidden)
    ba2 = init(kb3, (1, n_actions), n_actions)
    params = (w_rep, b_rep, wa1_s, wa1_id, ba1, wa2, ba2)

    observation = {"agent_0": obs}
    avail_actions = {"agent_0": avail}

    # tile_b=32 -> B_pad=64, grid=(2,): exercises multi-step pipelining + padding
    rnn_hidden_new, act_probs = coma_policy_forward(
        observation, agent_ids, avail_actions, epsilon, params, tile_b=32)
    out = jax.block_until_ready(act_probs["agent_0"])

    assert out.shape == (B, n_actions)

    # check against a bf16-matmul-matched reference (tight) ...
    ref_bf16 = _reference_forward(observation, agent_ids, avail_actions, epsilon,
                                  params, matmul_dtype=jnp.bfloat16)
    assert jnp.allclose(out, ref_bf16, atol=5e-3, rtol=5e-3), \
        "mismatch vs. bf16-matched pure-JAX reference"

    # ... and against the exact f32 reference (loose, bounds the bf16/approx-recip error)
    ref_f32 = _reference_forward(observation, agent_ids, avail_actions, epsilon,
                                 params, matmul_dtype=jnp.float32)
    assert jnp.allclose(out, ref_f32, atol=3e-2, rtol=3e-2), \
        "mismatch vs. exact f32 pure-JAX reference"

    print("KERNEL_OK")
</pallas_src>

<mosaic_0001>
module attributes {stable_mosaic.version = 11 : i64} {
  func.func @coma_actor_kernel(%arg0: i32, %arg1: memref<32x16xbf16, #tpu.memory_space<vmem>>, %arg2: memref<32x3xbf16, #tpu.memory_space<vmem>>, %arg3: memref<32x8xf32, #tpu.memory_space<vmem>>, %arg4: memref<1x1xf32, #tpu.memory_space<smem>>, %arg5: memref<16x32xbf16, #tpu.memory_space<vmem>>, %arg6: memref<1x32xf32, #tpu.memory_space<vmem>>, %arg7: memref<32x32xbf16, #tpu.memory_space<vmem>>, %arg8: memref<3x32xbf16, #tpu.memory_space<vmem>>, %arg9: memref<32x8xbf16, #tpu.memory_space<vmem>>, %arg10: memref<1x8xf32, #tpu.memory_space<vmem>>, %arg11: memref<32x8xf32, #tpu.memory_space<vmem>>) attributes {dimension_semantics = [#tpu.dimension_semantics<parallel>], iteration_bounds = array<i64: 2>, scalar_prefetch = 0 : i64, scratch_operands = 0 : i64, tpu.core_type = #tpu.core_type<tc>, window_params = [{transform_indices = @transform_0, window_bounds = array<i64: 32, 16>}, {transform_indices = @transform_1, window_bounds = array<i64: 32, 3>}, {transform_indices = @transform_2, window_bounds = array<i64: 32, 8>}, {transform_indices = @transform_3, window_bounds = array<i64: 1, 1>}, {pipeline_mode = #tpu.pipeline_mode<synchronous>, transform_indices = @transform_4, window_bounds = array<i64: 16, 32>}, {pipeline_mode = #tpu.pipeline_mode<synchronous>, transform_indices = @transform_5, window_bounds = array<i64: 1, 32>}, {pipeline_mode = #tpu.pipeline_mode<synchronous>, transform_indices = @transform_6, window_bounds = array<i64: 32, 32>}, {pipeline_mode = #tpu.pipeline_mode<synchronous>, transform_indices = @transform_7, window_bounds = array<i64: 3, 32>}, {pipeline_mode = #tpu.pipeline_mode<synchronous>, transform_indices = @transform_8, window_bounds = array<i64: 32, 8>}, {pipeline_mode = #tpu.pipeline_mode<synchronous>, transform_indices = @transform_9, window_bounds = array<i64: 1, 8>}, {transform_indices = @transform_10, window_bounds = array<i64: 32, 8>}]} {
    %c0 = arith.constant 0 : index
    %c0_0 = arith.constant 0 : index
    %0 = memref.load %arg4[%c0, %c0_0] : memref<1x1xf32, #tpu.memory_space<smem>>
    %c0_1 = arith.constant 0 : index
    %c0_2 = arith.constant 0 : index
    %1 = vector.load %arg1[%c0_1, %c0_2] : memref<32x16xbf16, #tpu.memory_space<vmem>>, vector<32x16xbf16>
    %c0_3 = arith.constant 0 : index
    %c0_4 = arith.constant 0 : index
    %2 = vector.load %arg5[%c0_3, %c0_4] : memref<16x32xbf16, #tpu.memory_space<vmem>>, vector<16x32xbf16>
    %cst = arith.constant dense<0.000000e+00> : vector<32x32xf32>
    %3 = tpu.matmul %1, %2, %cst {dimension_numbers = #tpu.dot_dimension_numbers<[1], [0], [0], [1], [0, 0, 1, 1], [], []>} : vector<32x16xbf16>, vector<16x32xbf16>, vector<32x32xf32> -> vector<32x32xf32>
    %c0_5 = arith.constant 0 : index
    %c0_6 = arith.constant 0 : index
    %4 = vector.load %arg6[%c0_5, %c0_6] : memref<1x32xf32, #tpu.memory_space<vmem>>, vector<1x32xf32>
    %5 = vector.broadcast %4 : vector<1x32xf32> to vector<32x32xf32>
    %6 = arith.addf %3, %5 : vector<32x32xf32>
    %cst_7 = arith.constant 0.000000e+00 : f32
    %7 = vector.broadcast %cst_7 : f32 to vector<32x32xf32>
    %8 = arith.maximumf %6, %7 : vector<32x32xf32>
    %9 = arith.truncf %8 : vector<32x32xf32> to vector<32x32xbf16>
    %c0_8 = arith.constant 0 : index
    %c0_9 = arith.constant 0 : index
    %10 = vector.load %arg7[%c0_8, %c0_9] : memref<32x32xbf16, #tpu.memory_space<vmem>>, vector<32x32xbf16>
    %cst_10 = arith.constant dense<0.000000e+00> : vector<32x32xf32>
    %11 = tpu.matmul %9, %10, %cst_10 {dimension_numbers = #tpu.dot_dimension_numbers<[1], [0], [0], [1], [0, 0, 1, 1], [], []>} : vector<32x32xbf16>, vector<32x32xbf16>, vector<32x32xf32> -> vector<32x32xf32>
    %c0_11 = arith.constant 0 : index
    %c0_12 = arith.constant 0 : index
    %12 = vector.load %arg2[%c0_11, %c0_12] : memref<32x3xbf16, #tpu.memory_space<vmem>>, vector<32x3xbf16>
    %c0_13 = arith.constant 0 : index
    %c0_14 = arith.constant 0 : index
    %13 = vector.load %arg8[%c0_13, %c0_14] : memref<3x32xbf16, #tpu.memory_space<vmem>>, vector<3x32xbf16>
    %cst_15 = arith.constant dense<0.000000e+00> : vector<32x32xf32>
    %14 = tpu.matmul %12, %13, %cst_15 {dimension_numbers = #tpu.dot_dimension_numbers<[1], [0], [0], [1], [0, 0, 1, 1], [], []>} : vector<32x3xbf16>, vector<3x32xbf16>, vector<32x32xf32> -> vector<32x32xf32>
    %15 = arith.addf %11, %14 : vector<32x32xf32>
    %cst_16 = arith.constant 0.000000e+00 : f32
    %16 = vector.broadcast %cst_16 : f32 to vector<32x32xf32>
    %17 = arith.maximumf %15, %16 : vector<32x32xf32>
    %18 = arith.truncf %17 : vector<32x32xf32> to vector<32x32xbf16>
    %c0_17 = arith.constant 0 : index
    %c0_18 = arith.constant 0 : index
    %19 = vector.load %arg9[%c0_17, %c0_18] : memref<32x8xbf16, #tpu.memory_space<vmem>>, vector<32x8xbf16>
    %cst_19 = arith.constant dense<0.000000e+00> : vector<32x8xf32>
    %20 = tpu.matmul %18, %19, %cst_19 {dimension_numbers = #tpu.dot_dimension_numbers<[1], [0], [0], [1], [0, 0, 1, 1], [], []>} : vector<32x32xbf16>, vector<32x8xbf16>, vector<32x8xf32> -> vector<32x8xf32>
    %c0_20 = arith.constant 0 : index
    %c0_21 = arith.constant 0 : index
    %21 = vector.load %arg10[%c0_20, %c0_21] : memref<1x8xf32, #tpu.memory_space<vmem>>, vector<1x8xf32>
    %22 = vector.broadcast %21 : vector<1x8xf32> to vector<32x8xf32>
    %23 = arith.addf %20, %22 : vector<32x8xf32>
    %cst_22 = arith.constant dense<0xFF800000> : vector<32xf32>
    %24 = vector.multi_reduction <maximumf>, %23, %cst_22 [1] : vector<32x8xf32> to vector<32xf32>
    %25 = vector.shape_cast %24 : vector<32xf32> to vector<32x1xf32>
    %26 = vector.broadcast %25 : vector<32x1xf32> to vector<32x8xf32>
    %27 = arith.subf %23, %26 : vector<32x8xf32>
    %28 = math.exp %27 : vector<32x8xf32>
    %cst_23 = arith.constant dense<0.000000e+00> : vector<32xf32>
    %29 = vector.multi_reduction <add>, %28, %cst_23 [1] : vector<32x8xf32> to vector<32xf32>
    %30 = vector.shape_cast %29 : vector<32xf32> to vector<32x1xf32>
    %cst_24 = arith.constant 1.000000e+00 : f32
    %31 = arith.subf %cst_24, %0 : f32
    %32 = tpu.reciprocal %30 {approx = true} : vector<32x1xf32> -> vector<32x1xf32>
    %33 = vector.broadcast %31 : f32 to vector<32x1xf32>
    %34 = arith.mulf %33, %32 : vector<32x1xf32>
    %35 = vector.broadcast %34 : vector<32x1xf32> to vector<32x8xf32>
    %36 = arith.mulf %28, %35 : vector<32x8xf32>
    %cst_25 = arith.constant 8.000000e+00 : f32
    %37 = arith.divf %0, %cst_25 : f32
    %38 = vector.broadcast %37 : f32 to vector<32x8xf32>
    %39 = arith.addf %36, %38 : vector<32x8xf32>
    %c0_26 = arith.constant 0 : index
    %c0_27 = arith.constant 0 : index
    %40 = vector.load %arg3[%c0_26, %c0_27] : memref<32x8xf32, #tpu.memory_space<vmem>>, vector<32x8xf32>
    %cst_28 = arith.constant 0.000000e+00 : f32
    %41 = vector.broadcast %cst_28 : f32 to vector<32x8xf32>
    %42 = arith.cmpf oeq, %40, %41 : vector<32x8xf32>
    %cst_29 = arith.constant 0.000000e+00 : f32
    %43 = vector.broadcast %cst_29 : f32 to vector<32x8xf32>
    %44 = arith.select %42, %43, %39 : vector<32x8xi1>, vector<32x8xf32>
    %c0_30 = arith.constant 0 : index
    %c0_31 = arith.constant 0 : index
    %45 = vector.load %arg11[%c0_30, %c0_31] : memref<32x8xf32, #tpu.memory_space<vmem>>, vector<32x8xf32>
    tpu.vector_store %arg11[%c0_30, %c0_31], %44 {strides = array<i32>} : memref<32x8xf32, #tpu.memory_space<vmem>>, vector<32x8xf32>,
    return
  }
  func.func @transform_0(%arg0: i32) -> (i32, i32) {
    %c0_i32 = arith.constant 0 : i32
    %c0_i32_0 = arith.constant 0 : i32
    return %arg0, %c0_i32 : i32, i32
  }
  func.func @transform_1(%arg0: i32) -> (i32, i32) {
    %c0_i32 = arith.constant 0 : i32
    %c0_i32_0 = arith.constant 0 : i32
    return %arg0, %c0_i32 : i32, i32
  }
  func.func @transform_2(%arg0: i32) -> (i32, i32) {
    %c0_i32 = arith.constant 0 : i32
    %c0_i32_0 = arith.constant 0 : i32
    return %arg0, %c0_i32 : i32, i32
  }
  func.func @transform_3(%arg0: i32) -> (i32, i32) {
    %c0_i32 = arith.constant 0 : i32
    %c0_i32_0 = arith.constant 0 : i32
    %c0_i32_1 = arith.constant 0 : i32
    return %c0_i32, %c0_i32_0 : i32, i32
  }
  func.func @transform_4(%arg0: i32) -> (i32, i32) {
    %c0_i32 = arith.constant 0 : i32
    %c0_i32_0 = arith.constant 0 : i32
    %c0_i32_1 = arith.constant 0 : i32
    return %c0_i32, %c0_i32_0 : i32, i32
  }
  func.func @transform_5(%arg0: i32) -> (i32, i32) {
    %c0_i32 = arith.constant 0 : i32
    %c0_i32_0 = arith.constant 0 : i32
    %c0_i32_1 = arith.constant 0 : i32
    return %c0_i32, %c0_i32_0 : i32, i32
  }
  func.func @transform_6(%arg0: i32) -> (i32, i32) {
    %c0_i32 = arith.constant 0 : i32
    %c0_i32_0 = arith.constant 0 : i32
    %c0_i32_1 = arith.constant 0 : i32
    return %c0_i32, %c0_i32_0 : i32, i32
  }
  func.func @transform_7(%arg0: i32) -> (i32, i32) {
    %c0_i32 = arith.constant 0 : i32
    %c0_i32_0 = arith.constant 0 : i32
    %c0_i32_1 = arith.constant 0 : i32
    return %c0_i32, %c0_i32_0 : i32, i32
  }
  func.func @transform_8(%arg0: i32) -> (i32, i32) {
    %c0_i32 = arith.constant 0 : i32
    %c0_i32_0 = arith.constant 0 : i32
    %c0_i32_1 = arith.constant 0 : i32
    return %c0_i32, %c0_i32_0 : i32, i32
  }
  func.func @transform_9(%arg0: i32) -> (i32, i32) {
    %c0_i32 = arith.constant 0 : i32
    %c0_i32_0 = arith.constant 0 : i32
    %c0_i32_1 = arith.constant 0 : i32
    return %c0_i32, %c0_i32_0 : i32, i32
  }
  func.func @transform_10(%arg0: i32) -> (i32, i32) {
    %c0_i32 = arith.constant 0 : i32
    %c0_i32_0 = arith.constant 0 : i32
    return %arg0, %c0_i32 : i32, i32
  }
}

</mosaic_0001>

<llo_original>
// kernel: tpu_custom_call.1
$region0: #{tpu_custom_call.1}
  #allocation0 [shape = 'u32[]', space=smem, size = 0x4, offset = 0x4, fixed_abs, tag = 'smem constant byte address 0x4 - core index']
  #allocation1 [shape = 'u32[72,128]{1,0:T(1,128)}', space=vmem, size = 0x9000, scoped, tag = 'internal scratch']
  #allocation2 [shape = 'f32[1,1]{1,0:T(1,128)S(6)}', space=smem, size = 0x200, scoped, tag = 'scoped memory for tpu_custom_call.1']
  %s0 = inlined_call_operand.vmem [shape: bf16[64,16], index: 0, kind: input, shape index: {}]
  %s1 = inlined_call_operand.vmem [shape: bf16[64,3], index: 1, kind: input, shape index: {}]
  %s2 = inlined_call_operand.vmem [shape: f32[64,8], index: 2, kind: input, shape index: {}]
  %s3 = inlined_call_operand.<no memory space> [shape: f32[1,1], index: 3, kind: input, shape index: {}]
  %s4 = inlined_call_operand.vmem [shape: bf16[16,32], index: 4, kind: input, shape index: {}]
  %s5 = inlined_call_operand.vmem [shape: f32[1,32], index: 5, kind: input, shape index: {}]
  %s6 = inlined_call_operand.vmem [shape: bf16[32,32], index: 6, kind: input, shape index: {}]
  %s7 = inlined_call_operand.vmem [shape: bf16[3,32], index: 7, kind: input, shape index: {}]
  %s8 = inlined_call_operand.vmem [shape: bf16[32,8], index: 8, kind: input, shape index: {}]
  %s9 = inlined_call_operand.vmem [shape: f32[1,8], index: 9, kind: input, shape index: {}]
  %s10 = inlined_call_operand.vmem [shape: f32[64,8], index: 10, kind: output, shape index: {}]
  %s11 = sld [smem:[#allocation0]]
  $region73: #{tpu_custom_call.1} parent=0
    _
  %s13 = ssub.s32 1, %s11
  %s14 = scalar_select 0, %s13, %s11
  %15 = sst [smem:[#allocation2]] %s3
  loop: start=0, step=1, limit=4
  $region2: #{tpu_custom_call.1} parent=0 // loop_pre_header
    _
  $region3: #{tpu_custom_call.1} parent=0 // loop_header
    %s17 = sphi 0, %s21
    %p18 = scmp.ge.s32.totalorder %s17, 4
    %s27 = sphi 0, %s29
    %s30 = sphi 0, %s27
    %s31 = sphi 0, %s30
    %s47 = sphi 0, %s31
    %s53 = sphi 0, %s55
    %s56 = sphi 0, %s53
    %s57 = sphi 0, %s56
    %s73 = sphi 0, %s57
    %s79 = sphi 0, %s81
    %s82 = sphi 0, %s79
    %s83 = sphi 0, %s82
    %s99 = sphi 0, %s83
    %s103 = sphi 0, %s103
    %s105 = sphi 0, %s103
    %s106 = sphi 0, %s105
    %s120 = sphi 0, %s106
    %s124 = sphi 0, %s124
    %s126 = sphi 0, %s124
    %s127 = sphi 0, %s126
    %s141 = sphi 0, %s127
    %s145 = sphi 0, %s145
    %s147 = sphi 0, %s145
    %s148 = sphi 0, %s147
    %s162 = sphi 0, %s148
    %s166 = sphi 0, %s166
    %s168 = sphi 0, %s166
    %s169 = sphi 0, %s168
    %s183 = sphi 0, %s169
    %s187 = sphi 0, %s187
    %s189 = sphi 0, %s187
    %s190 = sphi 0, %s189
    %s204 = sphi 0, %s190
    %s208 = sphi 0, %s208
    %s210 = sphi 0, %s208
    %s211 = sphi 0, %s210
    %s225 = sphi 0, %s211
    %s229 = sphi 0, %s229
    %s231 = sphi 0, %s229
    %s232 = sphi 0, %s231
    %s246 = sphi 0, %s232
    %s252 = sphi 0, %s254
    %s255 = sphi 0, %s252
    %s256 = sphi 0, %s255
    %s272 = sphi 0, %s256
  $region4: #{tpu_custom_call.1} parent=0 // loop_header_branch
    %20 = sbr.rel (%p18) target = $region8
  $region5: #{tpu_custom_call.1} parent=0 // loop_body
    %s22 = ssub.s32 %s17, 1
    %s23 = ssub.s32 %s17, 2
    %s24 = sadd.s32 %s17, 1
    %s25 = ssub.s32 %s17, %s24
    %p26 = scmp.eq.s32.totalorder %s25, 0
    %s28 = sadd.s32 %s27, 1
    %s29 = scalar_select %p26, %s27, %s28
    %p32 = pneg %p26
    %p33 = scmp.eq.s32.totalorder %s17, 1
    %p34 = por %p32, %p33
    %p35 = scmp.ne.s32.totalorder %s27, %s30
    %p36 = scmp.eq.s32.totalorder %s17, 0
    %p37 = por %p35, %p36
    %p38 = scmp.ne.s32.totalorder %s27, %s30
    %p39 = scmp.eq.s32.totalorder %s22, 1
    %p40 = por %p38, %p39
    %p41 = scmp.ne.s32.totalorder %s30, %s31
    %p42 = scmp.eq.s32.totalorder %s22, 0
    %p43 = por %p41, %p42
    %p44 = scmp.ne.s32.totalorder %s30, %s31
    %p45 = scmp.eq.s32.totalorder %s23, 1
    %p46 = por %p44, %p45
    %p48 = scmp.ne.s32.totalorder %s31, %s47
    %p49 = scmp.eq.s32.totalorder %s23, 0
    %p50 = por %p48, %p49
    %s51 = ssub.s32 %s17, %s24
    %p52 = scmp.eq.s32.totalorder %s51, 0
    %s54 = sadd.s32 %s53, 1
    %s55 = scalar_select %p52, %s53, %s54
    %p58 = pneg %p52
    %p59 = scmp.eq.s32.totalorder %s17, 1
    %p60 = por %p58, %p59
    %p61 = scmp.ne.s32.totalorder %s53, %s56
    %p62 = scmp.eq.s32.totalorder %s17, 0
    %p63 = por %p61, %p62
    %p64 = scmp.ne.s32.totalorder %s53, %s56
    %p65 = scmp.eq.s32.totalorder %s22, 1
    %p66 = por %p64, %p65
    %p67 = scmp.ne.s32.totalorder %s56, %s57
    %p68 = scmp.eq.s32.totalorder %s22, 0
    %p69 = por %p67, %p68
    %p70 = scmp.ne.s32.totalorder %s56, %s57
    %p71 = scmp.eq.s32.totalorder %s23, 1
    %p72 = por %p70, %p71
    %p74 = scmp.ne.s32.totalorder %s57, %s73
    %p75 = scmp.eq.s32.totalorder %s23, 0
    %p76 = por %p74, %p75
    %s77 = ssub.s32 %s17, %s24
    %p78 = scmp.eq.s32.totalorder %s77, 0
    %s80 = sadd.s32 %s79, 1
    %s81 = scalar_select %p78, %s79, %s80
    %p84 = pneg %p78
    %p85 = scmp.eq.s32.totalorder %s17, 1
    %p86 = por %p84, %p85
    %p87 = scmp.ne.s32.totalorder %s79, %s82
    %p88 = scmp.eq.s32.totalorder %s17, 0
    %p89 = por %p87, %p88
    %p90 = scmp.ne.s32.totalorder %s79, %s82
    %p91 = scmp.eq.s32.totalorder %s22, 1
    %p92 = por %p90, %p91
    %p93 = scmp.ne.s32.totalorder %s82, %s83
    %p94 = scmp.eq.s32.totalorder %s22, 0
    %p95 = por %p93, %p94
    %p96 = scmp.ne.s32.totalorder %s82, %s83
    %p97 = scmp.eq.s32.totalorder %s23, 1
    %p98 = por %p96, %p97
    %p100 = scmp.ne.s32.totalorder %s83, %s99
    %p101 = scmp.eq.s32.totalorder %s23, 0
    %p102 = por %p100, %p101
    %s104 = sadd.s32 %s103, 1
    %p107 = scmp.eq.s32.totalorder %s17, 1
    %p108 = scmp.ne.s32.totalorder %s103, %s105
    %p109 = scmp.eq.s32.totalorder %s17, 0
    %p110 = por %p108, %p109
    %p111 = scmp.ne.s32.totalorder %s103, %s105
    %p112 = scmp.eq.s32.totalorder %s22, 1
    %p113 = por %p111, %p112
    %p114 = scmp.ne.s32.totalorder %s105, %s106
    %p115 = scmp.eq.s32.totalorder %s22, 0
    %p116 = por %p114, %p115
    %p117 = scmp.ne.s32.totalorder %s105, %s106
    %p118 = scmp.eq.s32.totalorder %s23, 1
    %p119 = por %p117, %p118
    %p121 = scmp.ne.s32.totalorder %s106, %s120
    %p122 = scmp.eq.s32.totalorder %s23, 0
    %p123 = por %p121, %p122
    %s125 = sadd.s32 %s124, 1
    %p128 = scmp.eq.s32.totalorder %s17, 1
    %p129 = scmp.ne.s32.totalorder %s124, %s126
    %p130 = scmp.eq.s32.totalorder %s17, 0
    %p131 = por %p129, %p130
    %p132 = scmp.ne.s32.totalorder %s124, %s126
    %p133 = scmp.eq.s32.totalorder %s22, 1
    %p134 = por %p132, %p133
    %p135 = scmp.ne.s32.totalorder %s126, %s127
    %p136 = scmp.eq.s32.totalorder %s22, 0
    %p137 = por %p135, %p136
    %p138 = scmp.ne.s32.totalorder %s126, %s127
    %p139 = scmp.eq.s32.totalorder %s23, 1
    %p140 = por %p138, %p139
    %p142 = scmp.ne.s32.totalorder %s127, %s141
    %p143 = scmp.eq.s32.totalorder %s23, 0
    %p144 = por %p142, %p143
    %s146 = sadd.s32 %s145, 1
    %p149 = scmp.eq.s32.totalorder %s17, 1
    %p150 = scmp.ne.s32.totalorder %s145, %s147
    %p151 = scmp.eq.s32.totalorder %s17, 0
    %p152 = por %p150, %p151
    %p153 = scmp.ne.s32.totalorder %s145, %s147
    %p154 = scmp.eq.s32.totalorder %s22, 1
    %p155 = por %p153, %p154
    %p156 = scmp.ne.s32.totalorder %s147, %s148
    %p157 = scmp.eq.s32.totalorder %s22, 0
    %p158 = por %p156, %p157
    %p159 = scmp.ne.s32.totalorder %s147, %s148
    %p160 = scmp.eq.s32.totalorder %s23, 1
    %p161 = por %p159, %p160
    %p163 = scmp.ne.s32.totalorder %s148, %s162
    %p164 = scmp.eq.s32.totalorder %s23, 0
    %p165 = por %p163, %p164
    %s167 = sadd.s32 %s166, 1
    %p170 = scmp.eq.s32.totalorder %s17, 1
    %p171 = scmp.ne.s32.totalorder %s166, %s168
    %p172 = scmp.eq.s32.totalorder %s17, 0
    %p173 = por %p171, %p172
    %p174 = scmp.ne.s32.totalorder %s166, %s168
    %p175 = scmp.eq.s32.totalorder %s22, 1
    %p176 = por %p174, %p175
    %p177 = scmp.ne.s32.totalorder %s168, %s169
    %p178 = scmp.eq.s32.totalorder %s22, 0
    %p179 = por %p177, %p178
    %p180 = scmp.ne.s32.totalorder %s168, %s169
    %p181 = scmp.eq.s32.totalorder %s23, 1
    %p182 = por %p180, %p181
    %p184 = scmp.ne.s32.totalorder %s169, %s183
    %p185 = scmp.eq.s32.totalorder %s23, 0
    %p186 = por %p184, %p185
    %s188 = sadd.s32 %s187, 1
    %p191 = scmp.eq.s32.totalorder %s17, 1
    %p192 = scmp.ne.s32.totalorder %s187, %s189
    %p193 = scmp.eq.s32.totalorder %s17, 0
    %p194 = por %p192, %p193
    %p195 = scmp.ne.s32.totalorder %s187, %s189
    %p196 = scmp.eq.s32.totalorder %s22, 1
    %p197 = por %p195, %p196
    %p198 = scmp.ne.s32.totalorder %s189, %s190
    %p199 = scmp.eq.s32.totalorder %s22, 0
    %p200 = por %p198, %p199
    %p201 = scmp.ne.s32.totalorder %s189, %s190
    %p202 = scmp.eq.s32.totalorder %s23, 1
    %p203 = por %p201, %p202
    %p205 = scmp.ne.s32.totalorder %s190, %s204
    %p206 = scmp.eq.s32.totalorder %s23, 0
    %p207 = por %p205, %p206
    %s209 = sadd.s32 %s208, 1
    %p212 = scmp.eq.s32.totalorder %s17, 1
    %p213 = scmp.ne.s32.totalorder %s208, %s210
    %p214 = scmp.eq.s32.totalorder %s17, 0
    %p215 = por %p213, %p214
    %p216 = scmp.ne.s32.totalorder %s208, %s210
    %p217 = scmp.eq.s32.totalorder %s22, 1
    %p218 = por %p216, %p217
    %p219 = scmp.ne.s32.totalorder %s210, %s211
    %p220 = scmp.eq.s32.totalorder %s22, 0
    %p221 = por %p219, %p220
    %p222 = scmp.ne.s32.totalorder %s210, %s211
    %p223 = scmp.eq.s32.totalorder %s23, 1
    %p224 = por %p222, %p223
    %p226 = scmp.ne.s32.totalorder %s211, %s225
    %p227 = scmp.eq.s32.totalorder %s23, 0
    %p228 = por %p226, %p227
    %s230 = sadd.s32 %s229, 1
    %p233 = scmp.eq.s32.totalorder %s17, 1
    %p234 = scmp.ne.s32.totalorder %s229, %s231
    %p235 = scmp.eq.s32.totalorder %s17, 0
    %p236 = por %p234, %p235
    %p237 = scmp.ne.s32.totalorder %s229, %s231
    %p238 = scmp.eq.s32.totalorder %s22, 1
    %p239 = por %p237, %p238
    %p240 = scmp.ne.s32.totalorder %s231, %s232
    %p241 = scmp.eq.s32.totalorder %s22, 0
    %p242 = por %p240, %p241
    %p243 = scmp.ne.s32.totalorder %s231, %s232
    %p244 = scmp.eq.s32.totalorder %s23, 1
    %p245 = por %p243, %p244
    %p247 = scmp.ne.s32.totalorder %s232, %s246
    %p248 = scmp.eq.s32.totalorder %s23, 0
    %p249 = por %p247, %p248
    %s250 = ssub.s32 %s17, %s24
    %p251 = scmp.eq.s32.totalorder %s250, 0
    %s253 = sadd.s32 %s252, 1
    %s254 = scalar_select %p251, %s252, %s253
    %p257 = pneg %p251
    %p258 = scmp.eq.s32.totalorder %s17, 1
    %p259 = por %p257, %p258
    %p260 = scmp.ne.s32.totalorder %s252, %s255
    %p261 = scmp.eq.s32.totalorder %s17, 0
    %p262 = por %p260, %p261
    %p263 = scmp.ne.s32.totalorder %s252, %s255
    %p264 = scmp.eq.s32.totalorder %s22, 1
    %p265 = por %p263, %p264
    %p266 = scmp.ne.s32.totalorder %s255, %s256
    %p267 = scmp.eq.s32.totalorder %s22, 0
    %p268 = por %p266, %p267
    %p269 = scmp.ne.s32.totalorder %s255, %s256
    %p270 = scmp.eq.s32.totalorder %s23, 1
    %p271 = por %p269, %p270
    %p273 = scmp.ne.s32.totalorder %s256, %s272
    %p274 = scmp.eq.s32.totalorder %s23, 0
    %p275 = por %p273, %p274
    %p276 = scmp.le.s32.totalorder 1, %s17
    %p277 = scmp.lt.s32.totalorder %s17, 3
    %p278 = pnand %p276, %p277
    %p279 = pneg %p278
    // Predicated region
    $region9: #{tpu_custom_call.1} parent=5 // pred_check
      _
    $region10: #{tpu_custom_call.1} parent=5 // pred_check_branch
      %281 = sbr.rel (%p278) target = $region12
    $region11: #{tpu_custom_call.1} parent=5 // pred_region
      %s282 = ssub.s32 %s17, 1
      // Predicated region
      $region13: #{tpu_custom_call.1} parent=11 // pred_check
        %p283 = pneg %p116
      $region14: #{tpu_custom_call.1} parent=11 // pred_check_branch
        %285 = sbr.rel (%p283) target = $region16
      $region15: #{tpu_custom_call.1} parent=11 // pred_region
        _
      $region16: #{tpu_custom_call.1} parent=11 // pred_fallthru
        _
      // Predicated region
      $region17: #{tpu_custom_call.1} parent=11 // pred_check
        %p286 = pneg %p137
      $region18: #{tpu_custom_call.1} parent=11 // pred_check_branch
        %288 = sbr.rel (%p286) target = $region20
      $region19: #{tpu_custom_call.1} parent=11 // pred_region
        _
      $region20: #{tpu_custom_call.1} parent=11 // pred_fallthru
        _
      // Predicated region
      $region21: #{tpu_custom_call.1} parent=11 // pred_check
        %p289 = pneg %p158
      $region22: #{tpu_custom_call.1} parent=11 // pred_check_branch
        %291 = sbr.rel (%p289) target = $region24
      $region23: #{tpu_custom_call.1} parent=11 // pred_region
        _
      $region24: #{tpu_custom_call.1} parent=11 // pred_fallthru
        _
      // Predicated region
      $region25: #{tpu_custom_call.1} parent=11 // pred_check
        %p292 = pneg %p179
      $region26: #{tpu_custom_call.1} parent=11 // pred_check_branch
        %294 = sbr.rel (%p292) target = $region28
      $region27: #{tpu_custom_call.1} parent=11 // pred_region
        _
      $region28: #{tpu_custom_call.1} parent=11 // pred_fallthru
        _
      // Predicated region
      $region29: #{tpu_custom_call.1} parent=11 // pred_check
        %p295 = pneg %p200
      $region30: #{tpu_custom_call.1} parent=11 // pred_check_branch
        %297 = sbr.rel (%p295) target = $region32
      $region31: #{tpu_custom_call.1} parent=11 // pred_region
        _
      $region32: #{tpu_custom_call.1} parent=11 // pred_fallthru
        _
      // Predicated region
      $region33: #{tpu_custom_call.1} parent=11 // pred_check
        %p298 = pneg %p221
      $region34: #{tpu_custom_call.1} parent=11 // pred_check_branch
        %300 = sbr.rel (%p298) target = $region36
      $region35: #{tpu_custom_call.1} parent=11 // pred_region
        _
      $region36: #{tpu_custom_call.1} parent=11 // pred_fallthru
        _
      // Predicated region
      $region37: #{tpu_custom_call.1} parent=11 // pred_check
        %p301 = pneg %p242
      $region38: #{tpu_custom_call.1} parent=11 // pred_check_branch
        %303 = sbr.rel (%p301) target = $region40
      $region39: #{tpu_custom_call.1} parent=11 // pred_region
        _
      $region40: #{tpu_custom_call.1} parent=11 // pred_fallthru
        _
    $region12: #{tpu_custom_call.1} parent=5 // pred_fallthru
      _
    %p304 = scmp.lt.s32.totalorder %s17, 2
    // Predicated region
    $region41: #{tpu_custom_call.1} parent=5 // pred_check
      %p305 = pneg %p304
    $region42: #{tpu_custom_call.1} parent=5 // pred_check_branch
      %307 = sbr.rel (%p305) target = $region44
    $region43: #{tpu_custom_call.1} parent=5 // pred_region
      // Predicated region
      $region45: #{tpu_custom_call.1} parent=43 // pred_check
        %p308 = pneg %p37
      $region46: #{tpu_custom_call.1} parent=43 // pred_check_branch
        %310 = sbr.rel (%p308) target = $region48
      $region47: #{tpu_custom_call.1} parent=43 // pred_region
        %s311 = smul.u32 4, %s17
        %p312 = scmp.lt.s32.totalorder %s311, 7
        %s313 = scalar_select %p312, %s311, 7
        %s314 = smul.addr %s313, 4
        %s315 = scalar_lea.vmem %s0, %s314
        %s316 = smul.u32 4, %s17
      $region48: #{tpu_custom_call.1} parent=43 // pred_fallthru
        _
      // Predicated region
      $region49: #{tpu_custom_call.1} parent=43 // pred_check
        %p317 = pneg %p63
      $region50: #{tpu_custom_call.1} parent=43 // pred_check_branch
        %319 = sbr.rel (%p317) target = $region52
      $region51: #{tpu_custom_call.1} parent=43 // pred_region
        %s320 = smul.u32 4, %s17
        %p321 = scmp.lt.s32.totalorder %s320, 7
        %s322 = scalar_select %p321, %s320, 7
        %s323 = smul.addr %s322, 4
        %s324 = scalar_lea.vmem %s1, %s323
        %s325 = smul.u32 4, %s17
      $region52: #{tpu_custom_call.1} parent=43 // pred_fallthru
        _
      // Predicated region
      $region53: #{tpu_custom_call.1} parent=43 // pred_check
        %p326 = pneg %p89
      $region54: #{tpu_custom_call.1} parent=43 // pred_check_branch
        %328 = sbr.rel (%p326) target = $region56
      $region55: #{tpu_custom_call.1} parent=43 // pred_region
        %s329 = smul.u32 4, %s17
        %p330 = scmp.lt.s32.totalorder %s329, 7
        %s331 = scalar_select %p330, %s329, 7
        %s332 = smul.addr %s331, 8
        %s333 = scalar_lea.vmem %s2, %s332
        %s334 = smul.u32 4, %s17
      $region56: #{tpu_custom_call.1} parent=43 // pred_fallthru
        _
    $region44: #{tpu_custom_call.1} parent=5 // pred_fallthru
      _
    %p335 = scmp.le.s32.totalorder 1, %s17
    %p336 = scmp.lt.s32.totalorder %s17, 3
    %p337 = pnand %p335, %p336
    %p338 = pneg %p337
    // Predicated region
    $region57: #{tpu_custom_call.1} parent=5 // pred_check
      _
    $region58: #{tpu_custom_call.1} parent=5 // pred_check_branch
      %340 = sbr.rel (%p337) target = $region60
    $region59: #{tpu_custom_call.1} parent=5 // pred_region
      %s341 = ssub.s32 %s17, 1
      %s342 = smul.u32 4, %s22
      %p343 = scmp.lt.s32.totalorder %s342, 7
      %s344 = scalar_select %p343, %s342, 7
      %s345 = smul.addr %s344, 4
      %s346 = scalar_lea.vmem %s0, %s345
      %p347 = pneg %p43
      %p348 = pneg %p40
      %s349 = smul.u32 4, %s22
      %p350 = scmp.lt.s32.totalorder %s349, 7
      %s351 = scalar_select %p350, %s349, 7
      %s352 = smul.addr %s351, 4
      %s353 = scalar_lea.vmem %s1, %s352
      %p354 = pneg %p69
      %p355 = pneg %p66
      %s356 = smul.u32 4, %s22
      %p357 = scmp.lt.s32.totalorder %s356, 7
      %s358 = scalar_select %p357, %s356, 7
      %s359 = smul.addr %s358, 8
      %s360 = scalar_lea.vmem %s2, %s359
      %p361 = pneg %p95
      %p362 = pneg %p92
      %p363 = pneg %p116
      %p364 = pneg %p113
      %p365 = pneg %p137
      %p366 = pneg %p134
      %p367 = pneg %p158
      %p368 = pneg %p155
      %p369 = pneg %p179
      %p370 = pneg %p176
      %p371 = pneg %p200
      %p372 = pneg %p197
      %p373 = pneg %p221
      %p374 = pneg %p218
      %p375 = pneg %p242
      %p376 = pneg %p239
      %p377 = pneg %p268
      %p378 = pneg %p265
      %s379 = smul.u32 4, %s22
      %p380 = scmp.lt.s32.totalorder %s379, 7
      %s381 = scalar_select %p380, %s379, 7
      %s382 = smul.addr %s381, 8
      %s383 = scalar_lea.vmem %s10, %s382
      %s384 = smul.u32 4, %s22
      %p385 = scmp.lt.s32.totalorder %s384, 7
      %s386 = scalar_select %p385, %s384, 7
      %s387 = smul.addr %s386, 4
      %s388 = scalar_lea.vmem %s0, %s387
      %s389 = smul.u32 4, %s22
      %s390 = smul.u32 4, %s22
      %p391 = scmp.lt.s32.totalorder %s390, 7
      %s392 = scalar_select %p391, %s390, 7
      %s393 = smul.addr %s392, 4
      %s394 = scalar_lea.vmem %s1, %s393
      %s395 = smul.u32 4, %s22
      %s396 = smul.u32 4, %s22
      %p397 = scmp.lt.s32.totalorder %s396, 7
      %s398 = scalar_select %p397, %s396, 7
      %s399 = smul.addr %s398, 8
      %s400 = scalar_lea.vmem %s2, %s399
      %s401 = smul.u32 4, %s22
      %s402 = smul.u32 4, %s22
      %p403 = scmp.lt.s32.totalorder %s402, 7
      %s404 = scalar_select %p403, %s402, 7
      %s405 = smul.addr %s404, 8
      %s406 = scalar_lea.vmem %s10, %s405
      %s407 = smul.u32 4, %s22
      %s409 = sld [smem:[#allocation2]]
      %v410 = vld [vmem:[%s388] sm:$0xf]
      %v411 = vld [vmem:[%s388 + $0x4] sm:$0xf]
      %v412 = vld [vmem:[%s388 + $0x8] sm:$0xf]
      %v413 = vld [vmem:[%s388 + $0xc] sm:$0xf]
      %v414 = vld [vmem:[%s4] sm:$0xf]
      %v415 = vld [vmem:[%s4 + $0x4] sm:$0xf]
      %v416 = vld [vmem:[%s5] sm:$0x1]
      %v418 = vperm.slane %v416, 0
      %v424 = vunpack.c.l.b16 %v410
      %v425 = vunpack.c.l.b16 %v411
      %v426 = vunpack.c.l.b16 %v412
      %v427 = vunpack.c.l.b16 %v413
      %v428 = vpack.c.b16 %v425, %v424
      %v429 = vpack.c.b16 %v427, %v426
      %v432 = vunpack.c.l.b16 %v414
      %v433 = vunpack.c.l.b16 %v415
      %v434 = vpack.c.b16 %v433, %v432
      %vm436 = vcmask 130048
      %v438 = vsel %vm436, %v428, 0
      %v441 = vsel %vm436, %v429, 0
      %443 = vmatpush.bf16.msra.mxu0 0
      %444 = vmatpush.bf16.msra.mxu0 0
      %445 = vmatpush.bf16.msra.mxu0 0
      %446 = vmatpush.bf16.msra.mxu0 0
      %447 = vmatpush.bf16.msra.mxu0 0
      %448 = vmatpush.bf16.msra.mxu0 0
      %449 = vmatpush.bf16.msra.mxu0 0
      %450 = vmatpush.bf16.msra.mxu0 %v434
      %451 = vmatmul.bf16.gmra.mxu0 %v438
      %v452 = vpop.f32.mrf.mxu0
      %v453 = vadd.f32 %v418, %v452
      %v454 = vpop.f32.mrf.mxu0
      %v455 = vadd.f32 %v418, %v454
      %456 = vmatmul.bf16.gmra.mxu0 %v441
      %v457 = vpop.f32.mrf.mxu0
      %v458 = vadd.f32 %v418, %v457
      %v459 = vpop.f32.mrf.mxu0
      %v460 = vadd.f32 %v418, %v459
      %461 = vdwg.mxu0
      %v462 = vmax.f32 %v453, 0.0
      %v463 = vmax.f32 %v455, 0.0
      %v464 = vmax.f32 %v458, 0.0
      %v465 = vmax.f32 %v460, 0.0
      %v466 = vpack.c.bf16 %v463, %v462
      %v467 = vpack.c.bf16 %v465, %v464
      %v468 = vld [vmem:[%s6] sm:$0xf]
      %v469 = vld [vmem:[%s6 + $0x4] sm:$0xf]
      %v470 = vld [vmem:[%s6 + $0x8] sm:$0xf]
      %v471 = vld [vmem:[%s6 + $0xc] sm:$0xf]
      %v472 = vld [vmem:[%s394] sm:$0xf]
      %v473 = vld [vmem:[%s394 + $0x4] sm:$0xf]
      %v474 = vld [vmem:[%s394 + $0x8] sm:$0xf]
      %v475 = vld [vmem:[%s394 + $0xc] sm:$0xf]
      %v476 = vld [vmem:[%s7] sm:$0x3]
      %v481 = vunpack.c.l.b16 %v472
      %v482 = vunpack.c.l.b16 %v473
      %v483 = vunpack.c.l.b16 %v474
      %v484 = vunpack.c.l.b16 %v475
      %v485 = vpack.c.b16 %v482, %v481
      %v486 = vpack.c.b16 %v484, %v483
      %vm487 = vcmask 23552
      %v489 = vsel %vm487, %v485, 0
      %v492 = vsel %vm487, %v486, 0
      %vm494 = vcmask 1040384
      %vm495 = vcmask 1041408
      %v496 = vsel %vm494, 4294967295, 65535
      %v497 = vsel %vm495, %v496, 0
      %v499 = vand.u32 %v476, %v497
      %501 = vmatpush.bf16.msra.mxu0 0
      %502 = vmatpush.bf16.msra.mxu0 0
      %503 = vmatpush.bf16.msra.mxu0 0
      %504 = vmatpush.bf16.msra.mxu0 0
      %505 = vmatpush.bf16.msra.mxu0 0
      %506 = vmatpush.bf16.msra.mxu0 0
      %507 = vmatpush.bf16.msra.mxu0 0
      %508 = vmatpush.bf16.msra.mxu0 %v499
      %509 = vmatmul.bf16.gmra.mxu0 %v489
      %v510 = vpop.f32.mrf.mxu0
      %v511 = vadd.f32 0.0, %v510
      %v512 = vpop.f32.mrf.mxu0
      %v513 = vadd.f32 0.0, %v512
      %514 = vmatmul.bf16.gmra.mxu0 %v492
      %v515 = vpop.f32.mrf.mxu0
      %v516 = vadd.f32 0.0, %v515
      %v517 = vpop.f32.mrf.mxu0
      %v518 = vadd.f32 0.0, %v517
      %519 = vdwg.mxu0
      %v524 = vunpack.c.l.b16 %v468
      %v525 = vunpack.c.l.b16 %v469
      %v526 = vunpack.c.l.b16 %v470
      %v527 = vunpack.c.l.b16 %v471
      %v528 = vpack.c.b16 %v525, %v524
      %v529 = vpack.c.b16 %v527, %v526
      %vm532 = vcmask 261120
      %v534 = vsel %vm532, %v466, 0
      %v537 = vsel %vm532, %v467, 0
      %539 = vmatpush.bf16.msra.mxu0 0
      %540 = vmatpush.bf16.msra.mxu0 0
      %541 = vmatpush.bf16.msra.mxu0 0
      %542 = vmatpush.bf16.msra.mxu0 0
      %543 = vmatpush.bf16.msra.mxu0 0
      %544 = vmatpush.bf16.msra.mxu0 0
      %545 = vmatpush.bf16.msra.mxu0 %v529
      %546 = vmatpush.bf16.msra.mxu0 %v528
      %547 = vmatmul.bf16.gmra.mxu0 %v534
      %v548 = vpop.f32.mrf.mxu0
      %v549 = vadd.f32 %v511, %v548
      %v550 = vpop.f32.mrf.mxu0
      %v551 = vadd.f32 %v513, %v550
      %552 = vmatmul.bf16.gmra.mxu0 %v537
      %v553 = vpop.f32.mrf.mxu0
      %v554 = vadd.f32 %v516, %v553
      %v555 = vpop.f32.mrf.mxu0
      %v556 = vadd.f32 %v518, %v555
      %557 = vdwg.mxu0
      %v558 = vmax.f32 %v549, 0.0
      %v559 = vmax.f32 %v551, 0.0
      %v560 = vmax.f32 %v554, 0.0
      %v561 = vmax.f32 %v556, 0.0
      %v562 = vpack.c.bf16 %v559, %v558
      %v563 = vpack.c.bf16 %v561, %v560
      %v564 = vld [vmem:[%s8] sm:$0xf]
      %v565 = vld [vmem:[%s8 + $0x4] sm:$0xf]
      %v566 = vld [vmem:[%s8 + $0x8] sm:$0xf]
      %v567 = vld [vmem:[%s8 + $0xc] sm:$0xf]
      %v568 = vld [vmem:[%s9] sm:$0x1]
      %v570 = vperm.slane %v568, 0
      %v576 = vunpack.c.l.b16 %v564
      %v577 = vunpack.c.l.b16 %v565
      %v578 = vunpack.c.l.b16 %v566
      %v579 = vunpack.c.l.b16 %v567
      %v580 = vpack.c.b16 %v577, %v576
      %v581 = vpack.c.b16 %v579, %v578
      %v585 = vsel %vm532, %v562, 0
      %v588 = vsel %vm532, %v563, 0
      %590 = vmatpush.bf16.msra.mxu0 0
      %591 = vmatpush.bf16.msra.mxu0 0
      %592 = vmatpush.bf16.msra.mxu0 0
      %593 = vmatpush.bf16.msra.mxu0 0
      %594 = vmatpush.bf16.msra.mxu0 0
      %595 = vmatpush.bf16.msra.mxu0 0
      %596 = vmatpush.bf16.msra.mxu0 %v581
      %597 = vmatpush.bf16.msra.mxu0 %v580
      %598 = vmatmul.bf16.gmra.mxu0 %v585
      %v599 = vpop.f32.mrf.mxu0
      %v600 = vadd.f32 %v570, %v599
      %v601 = vpop.f32.mrf.mxu0
      %v602 = vadd.f32 %v570, %v601
      %603 = vmatmul.bf16.gmra.mxu0 %v588
      %v604 = vpop.f32.mrf.mxu0
      %v605 = vadd.f32 %v570, %v604
      %v606 = vpop.f32.mrf.mxu0
      %v607 = vadd.f32 %v570, %v606
      %608 = vdwg.mxu0
      %vm609 = vcmask 64512
      %v610 = vsel %vm609, %v600, -inf
      %611 = vmax.xlane.f32.xlu0 %v610
      %v612 = vpop.xlane.xlu0 %611
      %v613 = vsel %vm609, %v602, -inf
      %614 = vmax.xlane.f32.xlu0 %v613
      %v615 = vpop.xlane.xlu0 %614
      %v616 = vsel %vm609, %v605, -inf
      %617 = vmax.xlane.f32.xlu0 %v616
      %v618 = vpop.xlane.xlu0 %617
      %v619 = vsel %vm609, %v607, -inf
      %620 = vmax.xlane.f32.xlu0 %v619
      %v621 = vpop.xlane.xlu0 %620
      %v622 = vsub.f32 %v600, %v612
      %v623 = vsub.f32 %v602, %v615
      %v624 = vsub.f32 %v605, %v618
      %v625 = vsub.f32 %v607, %v621
      %v626 = vmul.f32 %v622, 1.442695
      %v627 = vpow.pop %v626
      %v628 = vmul.f32 %v623, 1.442695
      %v629 = vpow.pop %v628
      %v630 = vmul.f32 %v624, 1.442695
      %v631 = vpow.pop %v630
      %v632 = vmul.f32 %v625, 1.442695
      %v633 = vpow.pop %v632
      %v634 = vsel %vm609, %v627, 0.0
      %635 = vadd.xlane.f32.xlu0 %v634
      %v636 = vpop.xlane.xlu0 %635
      %v637 = vsel %vm609, %v629, 0.0
      %638 = vadd.xlane.f32.xlu0 %v637
      %v639 = vpop.xlane.xlu0 %638
      %v640 = vsel %vm609, %v631, 0.0
      %641 = vadd.xlane.f32.xlu0 %v640
      %v642 = vpop.xlane.xlu0 %641
      %v643 = vsel %vm609, %v633, 0.0
      %644 = vadd.xlane.f32.xlu0 %v643
      %v645 = vpop.xlane.xlu0 %644
      %s646 = ssub.f32 1.0, %s409
      %v647 = vrcp.pop %v636
      %v648 = vrcp.pop %v639
      %v649 = vrcp.pop %v642
      %v650 = vrcp.pop %v645
      %v651 = vstv %s646
      %v652 = vmul.f32 %v651, %v647
      %v653 = vmul.f32 %v651, %v648
      %v654 = vmul.f32 %v651, %v649
      %v655 = vmul.f32 %v651, %v650
      %v656 = vmul.f32 %v627, %v652
      %v657 = vmul.f32 %v629, %v653
      %v658 = vmul.f32 %v631, %v654
      %v659 = vmul.f32 %v633, %v655
      %v660 = vrcp.pop 8.0
      %v661 = vmul.f32 8.0, %v660
      %v662 = vsub.f32 1.0, %v661
      %v663 = vmul.f32 %v660, %v662
      %v664 = vadd.f32 %v660, %v663
      %vm665 = vweird.f32 %v660
      %v666 = vsel %vm665, %v660, %v664
      %s667 = vtos %v666
      %s668 = smul.f32 %s409, %s667
      %v669 = vstv %s668
      %v670 = vadd.f32 %v656, %v669
      %v671 = vadd.f32 %v657, %v669
      %v672 = vadd.f32 %v658, %v669
      %v673 = vadd.f32 %v659, %v669
      %v674 = vld [vmem:[%s400] sm:$0xff]
      %v675 = vld [vmem:[%s400 + $0x8] sm:$0xff]
      %v676 = vld [vmem:[%s400 + $0x10] sm:$0xff]
      %v677 = vld [vmem:[%s400 + $0x18] sm:$0xff]
      %vm678 = vcmp.eq.f32.partialorder %v674, 0.0
      %vm679 = vcmp.eq.f32.partialorder %v675, 0.0
      %vm680 = vcmp.eq.f32.partialorder %v676, 0.0
      %vm681 = vcmp.eq.f32.partialorder %v677, 0.0
      %v682 = vsel %vm678, 0.0, %v670
      %v683 = vsel %vm679, 0.0, %v671
      %v684 = vsel %vm680, 0.0, %v672
      %v685 = vsel %vm681, 0.0, %v673
      %686 = vst.msk [vmem:[%s406] sm:$0xff] %vm609, %v682
      %687 = vst.msk [vmem:[%s406 + $0x8] sm:$0xff] %vm609, %v683
      %688 = vst.msk [vmem:[%s406 + $0x10] sm:$0xff] %vm609, %v684
      %689 = vst.msk [vmem:[%s406 + $0x18] sm:$0xff] %vm609, %v685
      %s690 = smul.u32 4, %s22
      %p691 = scmp.lt.s32.totalorder %s690, 7
      %s692 = scalar_select %p691, %s690, 7
      %s693 = smul.addr %s692, 8
      %s694 = scalar_lea.vmem %s10, %s693
      // Predicated region
      $region61: #{tpu_custom_call.1} parent=59 // pred_check
        %p695 = pneg %p265
      $region62: #{tpu_custom_call.1} parent=59 // pred_check_branch
        %697 = sbr.rel (%p695) target = $region64
      $region63: #{tpu_custom_call.1} parent=59 // pred_region
        %s698 = smul.u32 4, %s22
      $region64: #{tpu_custom_call.1} parent=59 // pred_fallthru
        _
    $region60: #{tpu_custom_call.1} parent=5 // pred_fallthru
      _
    %p699 = scmp.le.s32.totalorder 2, %s17
    // Predicated region
    $region65: #{tpu_custom_call.1} parent=5 // pred_check
      %p700 = pneg %p699
    $region66: #{tpu_custom_call.1} parent=5 // pred_check_branch
      %702 = sbr.rel (%p700) target = $region68
    $region67: #{tpu_custom_call.1} parent=5 // pred_region
      %s703 = ssub.s32 %s17, 2
      // Predicated region
      $region69: #{tpu_custom_call.1} parent=67 // pred_check
        %p704 = pneg %p271
      $region70: #{tpu_custom_call.1} parent=67 // pred_check_branch
        %706 = sbr.rel (%p704) target = $region72
      $region71: #{tpu_custom_call.1} parent=67 // pred_region
        %s707 = smul.u32 4, %s23
        %p708 = scmp.lt.s32.totalorder %s707, 7
        %s709 = scalar_select %p708, %s707, 7
        %s710 = smul.addr %s709, 8
        %s711 = scalar_lea.vmem %s10, %s710
      $region72: #{tpu_custom_call.1} parent=67 // pred_fallthru
        _
    $region68: #{tpu_custom_call.1} parent=5 // pred_fallthru
      _
  $region6: #{tpu_custom_call.1} parent=0 // loop_footer
    %s21 = sadd.s32 1, %s17
  $region7: #{tpu_custom_call.1} parent=0 // loop_footer_branch
    %16 = sbr.rel target = $region3
  $region8: #{tpu_custom_call.1} parent=0 // loop_exit
    _

</llo_original>
